<compile_context>
chip_gen: v5e
topology: v5e:2x2
jax: 0.10.0
libtpu: 0.0.40
codegen_flags: <defaults>
</compile_context>

<pallas_src>
import jax
import jax.numpy as jnp
from jax import lax
from jax.experimental import pallas as pl
from jax.experimental.pallas import tpu as pltpu

INPUT_DIM = 22  # len(feature_names)
H1, H2, OUT = 64, 32, 1
LANE = 128


def shapnn_kernel(x_ref, w1_ref, b1_ref, w2_ref, b2_ref, w3_ref, b3_ref, o_ref):
    # x_ref: (tb, INPUT_DIM) batch-major tile streamed straight from the
    # caller's (B, INPUT_DIM) array (no wrapper transpose / pad pass over x).
    cdt = w1_ref.dtype                      # MXU input dtype (f32 or bf16)
    x = x_ref[...].astype(cdt)

    # fc1 + ReLU.  Contract the minor dims of both operands (W1 is (out, in),
    # the x tile is (batch, in)) -> (H1, tb): feature-major activations with
    # the batch dense on the lane axis; f32 MXU accumulation.
    h1 = lax.dot_general(w1_ref[...], x, (((1,), (1,)), ((), ())),
                         preferred_element_type=jnp.float32)
    h1 = jnp.maximum(h1 + b1_ref[...], 0.0).astype(cdt)

    # fc2 + ReLU (standard (out, in) @ (in, tb) MXU matmul).
    h2 = jnp.dot(w2_ref[...], h1, preferred_element_type=jnp.float32)
    h2 = jnp.maximum(h2 + b2_ref[...], 0.0)            # stays f32

    # fc3 (32 -> 1) off the MXU: an M=1 matmul would issue as many MXU pushes
    # as the 64-wide layer for ~1/64 the work.  VPU broadcast-multiply against
    # the (H2, 1) weight column + sublane-axis reduce (XLU) instead.
    z = jnp.sum(h2 * w3_ref[...], axis=0, keepdims=True) + b3_ref[...]

    # Sigmoid: exp and approximate reciprocal both run on the EUP (free slot).
    o_ref[...] = pl.reciprocal(1.0 + jnp.exp(-z), approx=True)


def shapnn_forward(x, params, *, tb=16384, vmem_limit_bytes=48 * 1024 * 1024):
    """x: (B, INPUT_DIM) (PyTorch convention). Returns (B, 1) f32 probabilities.

    The batch is tiled along the grid; the last tile may read past row B
    (Pallas clamps the DMA, the padded rows hold unspecified values) and the
    corresponding garbage output columns are sliced off before returning — do
    not reduce over the padded output.
    """
    w1, b1, w2, b2, w3, b3 = params
    B = x.shape[0]
    assert x.shape[1] == INPUT_DIM

    # ---- batch tile selection -------------------------------------------
    b_ceil = ((B + 7) // 8) * 8                 # sublane-aligned batch
    tb = max(8, min(int(tb), 32768))            # VMEM-safe cap on all gens
    if b_ceil <= LANE:
        tb = b_ceil                             # single small tile
    else:
        tb = max(LANE, (tb // LANE) * LANE)     # lane-aligned output tiles
        # Keep >= 2 grid steps so "parallel" can shard across v7x's two TCs.
        if b_ceil >= 2 * LANE:
            tb = min(tb, max(LANE, (b_ceil // 2 // LANE) * LANE))
        tb = min(tb, ((b_ceil + LANE - 1) // LANE) * LANE)
    grid_n = pl.cdiv(B, tb)
    b_pad = grid_n * tb

    flops = 2 * b_pad * (INPUT_DIM * H1 + H1 * H2 + H2 * OUT)
    bytes_accessed = int(
        B * INPUT_DIM * x.dtype.itemsize            # streamed x (read once)
        + B * OUT * 4                               # streamed out (f32)
        + sum(int(p.size) * p.dtype.itemsize for p in params)  # resident weights
    )

    out_t = pl.pallas_call(
        shapnn_kernel,
        out_shape=jax.ShapeDtypeStruct((OUT, b_pad), jnp.float32),
        grid=(grid_n,),
        in_specs=[
            pl.BlockSpec((tb, INPUT_DIM), lambda i: (i, 0)),  # streamed x tiles
            pl.BlockSpec(w1.shape, lambda i: (0, 0)),         # resident weights
            pl.BlockSpec(b1.shape, lambda i: (0, 0)),
            pl.BlockSpec(w2.shape, lambda i: (0, 0)),
            pl.BlockSpec(b2.shape, lambda i: (0, 0)),
            pl.BlockSpec(w3.shape, lambda i: (0, 0)),
            pl.BlockSpec(b3.shape, lambda i: (0, 0)),
        ],
        out_specs=pl.BlockSpec((OUT, tb), lambda i: (0, i)),  # lane-dense stores
        compiler_params=pltpu.CompilerParams(
            dimension_semantics=("parallel",),  # megacore sharding on v7x
            vmem_limit_bytes=vmem_limit_bytes,
        ),
        cost_estimate=pl.CostEstimate(
            flops=flops, transcendentals=2 * b_pad, bytes_accessed=bytes_accessed
        ),
    )(x, w1, b1, w2, b2, w3, b3)

    # (1, b_pad) -> (B, 1); dropping the padded tail columns, trivial reshape.
    return out_t[:, :B].reshape(B, OUT)


def init_params(key, weight_dtype=jnp.float32):
    """nn.Linear-style U(-1/sqrt(fan_in), 1/sqrt(fan_in)) init.

    w1/w2 are PyTorch-native (out, in) in `weight_dtype`; w3 is stored as an
    (H2, 1) f32 column (it feeds the VPU, not the MXU); biases are (out, 1)
    f32 (the epilogue stays f32 on all generations).
    """
    ks = jax.random.split(key, 6)

    def linear(kw, kb, fan_in, fan_out):
        bound = 1.0 / jnp.sqrt(jnp.float32(fan_in))
        w = jax.random.uniform(kw, (fan_out, fan_in), jnp.float32, -bound, bound)
        b = jax.random.uniform(kb, (fan_out, 1), jnp.float32, -bound, bound)
        return w, b

    w1, b1 = linear(ks[0], ks[1], INPUT_DIM, H1)
    w2, b2 = linear(ks[2], ks[3], H1, H2)
    w3, b3 = linear(ks[4], ks[5], H2, OUT)
    return (w1.astype(weight_dtype), b1,
            w2.astype(weight_dtype), b2,
            w3.T.astype(jnp.float32), b3)  # w3 stored as (H2, 1) f32 column


def shapnn_reference(x, params):
    w1, b1, w2, b2, w3c, b3 = params
    w1f, w2f = w1.astype(jnp.float32), w2.astype(jnp.float32)
    h1 = jnp.maximum(x @ w1f.T + b1.T, 0.0)
    h2 = jnp.maximum(h1 @ w2f.T + b2.T, 0.0)
    return jax.nn.sigmoid(h2 @ w3c + b3.T)


if __name__ == "__main__":
    key = jax.random.PRNGKey(0)
    k_x, k_p, k_x2, k_x3 = jax.random.split(key, 4)

    # --- f32, tiny batch (single small-tile path).  Tolerance is 1e-2 because
    # the sigmoid uses the EUP approximate reciprocal (error ~1e-4). ---
    batch = 8
    x = jax.random.normal(k_x, (batch, INPUT_DIM), jnp.float32)
    params_f32 = init_params(k_p, weight_dtype=jnp.float32)
    out = jax.block_until_ready(shapnn_forward(x, params_f32))
    ref = shapnn_reference(x, params_f32)
    assert out.shape == (batch, OUT)
    assert jnp.allclose(out, ref, atol=1e-2, rtol=1e-2)

    # --- f32, multi-tile batch: uneven tail + >=2 grid steps (megacore path) ---
    batch3 = 1000
    x3 = jax.random.normal(k_x3, (batch3, INPUT_DIM), jnp.float32)
    out3 = jax.block_until_ready(shapnn_forward(x3, params_f32))
    ref3 = shapnn_reference(x3, params_f32)
    assert out3.shape == (batch3, OUT)
    assert jnp.allclose(out3, ref3, atol=1e-2, rtol=1e-2)

    # --- bf16 weights: MXU runs bf16 (x cast in-kernel), f32 epilogue ---
    batch2 = 200  # not a multiple of 128 -> exercises padded tail
    x2 = jax.random.normal(k_x2, (batch2, INPUT_DIM), jnp.float32)
    params_bf16 = init_params(k_p, weight_dtype=jnp.bfloat16)
    out2 = jax.block_until_ready(shapnn_forward(x2, params_bf16))
    ref2 = shapnn_reference(x2, params_bf16)
    assert out2.shape == (batch2, OUT)
    assert jnp.allclose(out2, ref2, atol=2e-2, rtol=2e-2)

    print("KERNEL_OK")
</pallas_src>

<mosaic_0001>
module attributes {stable_mosaic.version = 11 : i64} {
  func.func @shapnn_kernel(%arg0: i32, %arg1: memref<8x22xf32, #tpu.memory_space<vmem>>, %arg2: memref<64x22xf32, #tpu.memory_space<vmem>>, %arg3: memref<64x1xf32, #tpu.memory_space<vmem>>, %arg4: memref<32x64xf32, #tpu.memory_space<vmem>>, %arg5: memref<32x1xf32, #tpu.memory_space<vmem>>, %arg6: memref<32x1xf32, #tpu.memory_space<vmem>>, %arg7: memref<1x1xf32, #tpu.memory_space<vmem>>, %arg8: memref<1x8xf32, #tpu.memory_space<vmem>>) attributes {dimension_semantics = [#tpu.dimension_semantics<parallel>], iteration_bounds = array<i64: 1>, scalar_prefetch = 0 : i64, scratch_operands = 0 : i64, tpu.core_type = #tpu.core_type<tc>, window_params = [{transform_indices = @transform_0, window_bounds = array<i64: 8, 22>}, {pipeline_mode = #tpu.pipeline_mode<synchronous>, transform_indices = @transform_1, window_bounds = array<i64: 64, 22>}, {pipeline_mode = #tpu.pipeline_mode<synchronous>, transform_indices = @transform_2, window_bounds = array<i64: 64, 1>}, {pipeline_mode = #tpu.pipeline_mode<synchronous>, transform_indices = @transform_3, window_bounds = array<i64: 32, 64>}, {pipeline_mode = #tpu.pipeline_mode<synchronous>, transform_indices = @transform_4, window_bounds = array<i64: 32, 1>}, {pipeline_mode = #tpu.pipeline_mode<synchronous>, transform_indices = @transform_5, window_bounds = array<i64: 32, 1>}, {pipeline_mode = #tpu.pipeline_mode<synchronous>, transform_indices = @transform_6, window_bounds = array<i64: 1, 1>}, {transform_indices = @transform_7, window_bounds = array<i64: 1, 8>}]} {
    %c0 = arith.constant 0 : index
    %c0_0 = arith.constant 0 : index
    %0 = vector.load %arg1[%c0, %c0_0] : memref<8x22xf32, #tpu.memory_space<vmem>>, vector<8x22xf32>
    %c0_1 = arith.constant 0 : index
    %c0_2 = arith.constant 0 : index
    %1 = vector.load %arg2[%c0_1, %c0_2] : memref<64x22xf32, #tpu.memory_space<vmem>>, vector<64x22xf32>
    %cst = arith.constant dense<0.000000e+00> : vector<64x8xf32>
    %2 = tpu.matmul %1, %0, %cst {dimension_numbers = #tpu.dot_dimension_numbers<[1], [1], [0], [0], [0, 0, 1, 0], [], []>} : vector<64x22xf32>, vector<8x22xf32>, vector<64x8xf32> -> vector<64x8xf32>
    %c0_3 = arith.constant 0 : index
    %c0_4 = arith.constant 0 : index
    %3 = vector.load %arg3[%c0_3, %c0_4] : memref<64x1xf32, #tpu.memory_space<vmem>>, vector<64x1xf32>
    %4 = vector.broadcast %3 : vector<64x1xf32> to vector<64x8xf32>
    %5 = arith.addf %2, %4 : vector<64x8xf32>
    %cst_5 = arith.constant 0.000000e+00 : f32
    %6 = vector.broadcast %cst_5 : f32 to vector<64x8xf32>
    %7 = arith.maximumf %5, %6 : vector<64x8xf32>
    %c0_6 = arith.constant 0 : index
    %c0_7 = arith.constant 0 : index
    %8 = vector.load %arg4[%c0_6, %c0_7] : memref<32x64xf32, #tpu.memory_space<vmem>>, vector<32x64xf32>
    %cst_8 = arith.constant dense<0.000000e+00> : vector<32x8xf32>
    %9 = tpu.matmul %8, %7, %cst_8 {dimension_numbers = #tpu.dot_dimension_numbers<[1], [0], [0], [1], [0, 0, 1, 1], [], []>} : vector<32x64xf32>, vector<64x8xf32>, vector<32x8xf32> -> vector<32x8xf32>
    %c0_9 = arith.constant 0 : index
    %c0_10 = arith.constant 0 : index
    %10 = vector.load %arg5[%c0_9, %c0_10] : memref<32x1xf32, #tpu.memory_space<vmem>>, vector<32x1xf32>
    %11 = vector.broadcast %10 : vector<32x1xf32> to vector<32x8xf32>
    %12 = arith.addf %9, %11 : vector<32x8xf32>
    %cst_11 = arith.constant 0.000000e+00 : f32
    %13 = vector.broadcast %cst_11 : f32 to vector<32x8xf32>
    %14 = arith.maximumf %12, %13 : vector<32x8xf32>
    %c0_12 = arith.constant 0 : index
    %c0_13 = arith.constant 0 : index
    %15 = vector.load %arg6[%c0_12, %c0_13] : memref<32x1xf32, #tpu.memory_space<vmem>>, vector<32x1xf32>
    %16 = vector.broadcast %15 : vector<32x1xf32> to vector<32x8xf32>
    %17 = arith.mulf %14, %16 : vector<32x8xf32>
    %cst_14 = arith.constant dense<0.000000e+00> : vector<8xf32>
    %18 = vector.multi_reduction <add>, %17, %cst_14 [0] : vector<32x8xf32> to vector<8xf32>
    %19 = vector.shape_cast %18 : vector<8xf32> to vector<1x8xf32>
    %c0_15 = arith.constant 0 : index
    %c0_16 = arith.constant 0 : index
    %20 = vector.load %arg7[%c0_15, %c0_16] : memref<1x1xf32, #tpu.memory_space<vmem>>, vector<1x1xf32>
    %21 = vector.broadcast %20 : vector<1x1xf32> to vector<1x8xf32>
    %22 = arith.addf %19, %21 : vector<1x8xf32>
    %cst_17 = arith.constant 0.000000e+00 : f32
    %23 = vector.broadcast %cst_17 : f32 to vector<1x8xf32>
    %24 = arith.subf %23, %22 : vector<1x8xf32>
    %25 = math.exp %24 : vector<1x8xf32>
    %cst_18 = arith.constant 1.000000e+00 : f32
    %26 = vector.broadcast %cst_18 : f32 to vector<1x8xf32>
    %27 = arith.addf %26, %25 : vector<1x8xf32>
    %28 = tpu.reciprocal %27 {approx = true} : vector<1x8xf32> -> vector<1x8xf32>
    %c0_19 = arith.constant 0 : index
    %c0_20 = arith.constant 0 : index
    %29 = vector.load %arg8[%c0_19, %c0_20] : memref<1x8xf32, #tpu.memory_space<vmem>>, vector<1x8xf32>
    tpu.vector_store %arg8[%c0_19, %c0_20], %28 {strides = array<i32>} : memref<1x8xf32, #tpu.memory_space<vmem>>, vector<1x8xf32>,
    return
  }
  func.func @transform_0(%arg0: i32) -> (i32, i32) {
    %c0_i32 = arith.constant 0 : i32
    %c0_i32_0 = arith.constant 0 : i32
    return %arg0, %c0_i32 : i32, i32
  }
  func.func @transform_1(%arg0: i32) -> (i32, i32) {
    %c0_i32 = arith.constant 0 : i32
    %c0_i32_0 = arith.constant 0 : i32
    %c0_i32_1 = arith.constant 0 : i32
    return %c0_i32, %c0_i32_0 : i32, i32
  }
  func.func @transform_2(%arg0: i32) -> (i32, i32) {
    %c0_i32 = arith.constant 0 : i32
    %c0_i32_0 = arith.constant 0 : i32
    %c0_i32_1 = arith.constant 0 : i32
    return %c0_i32, %c0_i32_0 : i32, i32
  }
  func.func @transform_3(%arg0: i32) -> (i32, i32) {
    %c0_i32 = arith.constant 0 : i32
    %c0_i32_0 = arith.constant 0 : i32
    %c0_i32_1 = arith.constant 0 : i32
    return %c0_i32, %c0_i32_0 : i32, i32
  }
  func.func @transform_4(%arg0: i32) -> (i32, i32) {
    %c0_i32 = arith.constant 0 : i32
    %c0_i32_0 = arith.constant 0 : i32
    %c0_i32_1 = arith.constant 0 : i32
    return %c0_i32, %c0_i32_0 : i32, i32
  }
  func.func @transform_5(%arg0: i32) -> (i32, i32) {
    %c0_i32 = arith.constant 0 : i32
    %c0_i32_0 = arith.constant 0 : i32
    %c0_i32_1 = arith.constant 0 : i32
    return %c0_i32, %c0_i32_0 : i32, i32
  }
  func.func @transform_6(%arg0: i32) -> (i32, i32) {
    %c0_i32 = arith.constant 0 : i32
    %c0_i32_0 = arith.constant 0 : i32
    %c0_i32_1 = arith.constant 0 : i32
    return %c0_i32, %c0_i32_0 : i32, i32
  }
  func.func @transform_7(%arg0: i32) -> (i32, i32) {
    %c0_i32 = arith.constant 0 : i32
    %c0_i32_0 = arith.constant 0 : i32
    return %c0_i32, %arg0 : i32, i32
  }
}

</mosaic_0001>

<llo_original>
// kernel: tpu_custom_call.1
$region0: #{tpu_custom_call.1}
  #allocation0 [shape = 'u32[]', space=smem, size = 0x4, offset = 0x4, fixed_abs, tag = 'smem constant byte address 0x4 - core index']
  #allocation1 [shape = 'u32[72,128]{1,0:T(1,128)}', space=vmem, size = 0x9000, scoped, tag = 'internal scratch']
  #allocation2 [shape = 'f32[1,1]{1,0:T(1,128)S(1)}', space=vmem, size = 0x200, scoped, tag = 'scoped memory for tpu_custom_call.1']
  %s0 = inlined_call_operand.vmem [shape: f32[8,22], index: 0, kind: input, shape index: {}]
  %s1 = inlined_call_operand.vmem [shape: f32[64,22], index: 1, kind: input, shape index: {}]
  %s2 = inlined_call_operand.vmem [shape: f32[64,1], index: 2, kind: input, shape index: {}]
  %s3 = inlined_call_operand.vmem [shape: f32[32,64], index: 3, kind: input, shape index: {}]
  %s4 = inlined_call_operand.vmem [shape: f32[32,1], index: 4, kind: input, shape index: {}]
  %s5 = inlined_call_operand.vmem [shape: f32[32,1], index: 5, kind: input, shape index: {}]
  %s6 = inlined_call_operand.<no memory space> [shape: f32[1,1], index: 6, kind: input, shape index: {}]
  %s7 = inlined_call_operand.hbm [shape: f32[1,8], index: 7, kind: output, shape index: {}]
  %s8 = sld [smem:[#allocation0]]
  $region38: #{tpu_custom_call.1} parent=0
    _
  %s10 = ssub.s32 1, %s8
  %s11 = scalar_select 0, %s10, %s8
  %v12 = vstv %s6
  %13 = vst [vmem:[#allocation2] sm:$0x1] %v12
  $region1: #{tpu_custom_call.1} parent=0
    #allocation3 [shape = 'u8[512]{0}', space=vmem, size = 0x400, scoped, tag = 'output window, operand 0, single buffered']
    #allocation4 [shape = 's32[1]{0}', space=sflag, size = 0x4, scoped, tag = 'scoped memory for tpu_custom_call.1']
    %14 = vsyncpa [#allocation4], 0
    // Predicated region
    $region2: #{tpu_custom_call.1} parent=1 // pred_check
      _
    $region3: #{tpu_custom_call.1} parent=1 // pred_check_branch
      %16 = sbr.rel (0) target = $region5
    $region4: #{tpu_custom_call.1} parent=1 // pred_region
      _
    $region5: #{tpu_custom_call.1} parent=1 // pred_fallthru
      _
    // Predicated region
    $region6: #{tpu_custom_call.1} parent=1 // pred_check
      _
    $region7: #{tpu_custom_call.1} parent=1 // pred_check_branch
      %18 = sbr.rel (0) target = $region9
    $region8: #{tpu_custom_call.1} parent=1 // pred_region
      _
    $region9: #{tpu_custom_call.1} parent=1 // pred_fallthru
      _
    // Predicated region
    $region10: #{tpu_custom_call.1} parent=1 // pred_check
      _
    $region11: #{tpu_custom_call.1} parent=1 // pred_check_branch
      %20 = sbr.rel (0) target = $region13
    $region12: #{tpu_custom_call.1} parent=1 // pred_region
      _
    $region13: #{tpu_custom_call.1} parent=1 // pred_fallthru
      _
    // Predicated region
    $region14: #{tpu_custom_call.1} parent=1 // pred_check
      _
    $region15: #{tpu_custom_call.1} parent=1 // pred_check_branch
      %22 = sbr.rel (0) target = $region17
    $region16: #{tpu_custom_call.1} parent=1 // pred_region
      _
    $region17: #{tpu_custom_call.1} parent=1 // pred_fallthru
      _
    // Predicated region
    $region18: #{tpu_custom_call.1} parent=1 // pred_check
      _
    $region19: #{tpu_custom_call.1} parent=1 // pred_check_branch
      %24 = sbr.rel (0) target = $region21
    $region20: #{tpu_custom_call.1} parent=1 // pred_region
      _
    $region21: #{tpu_custom_call.1} parent=1 // pred_fallthru
      _
    // Predicated region
    $region22: #{tpu_custom_call.1} parent=1 // pred_check
      _
    $region23: #{tpu_custom_call.1} parent=1 // pred_check_branch
      %26 = sbr.rel (0) target = $region25
    $region24: #{tpu_custom_call.1} parent=1 // pred_region
      _
    $region25: #{tpu_custom_call.1} parent=1 // pred_fallthru
      _
    // Predicated region
    $region26: #{tpu_custom_call.1} parent=1 // pred_check
      _
    $region27: #{tpu_custom_call.1} parent=1 // pred_check_branch
      %28 = sbr.rel (0) target = $region29
    $region28: #{tpu_custom_call.1} parent=1 // pred_region
      _
    $region29: #{tpu_custom_call.1} parent=1 // pred_fallthru
      _
    %v29 = vld [vmem:[%s0] sm:$0xff]
    %v30 = vld [vmem:[%s1] sm:$0xff]
    %v31 = vld [vmem:[%s1 + $0x8] sm:$0xff]
    %v32 = vld [vmem:[%s1 + $0x10] sm:$0xff]
    %v33 = vld [vmem:[%s1 + $0x18] sm:$0xff]
    %v34 = vld [vmem:[%s1 + $0x20] sm:$0xff]
    %v35 = vld [vmem:[%s1 + $0x28] sm:$0xff]
    %v36 = vld [vmem:[%s1 + $0x30] sm:$0xff]
    %v37 = vld [vmem:[%s1 + $0x38] sm:$0xff]
    %v38 = vld [vmem:[%s2] sm:$0xff]
    %v39 = vld [vmem:[%s2 + $0x8] sm:$0xff]
    %v40 = vld [vmem:[%s2 + $0x10] sm:$0xff]
    %v41 = vld [vmem:[%s2 + $0x18] sm:$0xff]
    %v42 = vld [vmem:[%s2 + $0x20] sm:$0xff]
    %v43 = vld [vmem:[%s2 + $0x28] sm:$0xff]
    %v44 = vld [vmem:[%s2 + $0x30] sm:$0xff]
    %v45 = vld [vmem:[%s2 + $0x38] sm:$0xff]
    %47 = vset.pattern.permute.xlu0 0
    %48 = vperm.xlu0 %47, %v38
    %v49 = vpop.permute.xlu0 %48
    %52 = vset.pattern.permute.xlu0 0
    %53 = vperm.xlu0 %52, %v39
    %v54 = vpop.permute.xlu0 %53
    %57 = vset.pattern.permute.xlu0 0
    %58 = vperm.xlu0 %57, %v40
    %v59 = vpop.permute.xlu0 %58
    %62 = vset.pattern.permute.xlu0 0
    %63 = vperm.xlu0 %62, %v41
    %v64 = vpop.permute.xlu0 %63
    %67 = vset.pattern.permute.xlu0 0
    %68 = vperm.xlu0 %67, %v42
    %v69 = vpop.permute.xlu0 %68
    %72 = vset.pattern.permute.xlu0 0
    %73 = vperm.xlu0 %72, %v43
    %v74 = vpop.permute.xlu0 %73
    %77 = vset.pattern.permute.xlu0 0
    %78 = vperm.xlu0 %77, %v44
    %v79 = vpop.permute.xlu0 %78
    %82 = vset.pattern.permute.xlu0 0
    %83 = vperm.xlu0 %82, %v45
    %v84 = vpop.permute.xlu0 %83
    %vm86 = vcmask 179200
    %v88 = vsel %vm86, %v30, 0
    %v91 = vsel %vm86, %v31, 0
    %v94 = vsel %vm86, %v32, 0
    %v97 = vsel %vm86, %v33, 0
    %v100 = vsel %vm86, %v34, 0
    %v103 = vsel %vm86, %v35, 0
    %v106 = vsel %vm86, %v36, 0
    %v109 = vsel %vm86, %v37, 0
    %v112 = vsel %vm86, %v29, 0
    %114 = vmatpush.xpose.msra.mxu0 0.0
    %115 = vmatpush.xpose.msra.mxu0 0.0
    %116 = vmatpush.xpose.msra.mxu0 0.0
    %117 = vmatpush.xpose.msra.mxu0 0.0
    %118 = vmatpush.xpose.msra.mxu0 0.0
    %119 = vmatpush.xpose.msra.mxu0 0.0
    %120 = vmatpush.xpose.msra.mxu0 0.0
    %121 = vmatpush.xpose.msra.mxu0 0.0
    %122 = vmatpush.xpose.msra.mxu0 0.0
    %123 = vmatpush.xpose.msra.mxu0 0.0
    %124 = vmatpush.xpose.msra.mxu0 0.0
    %125 = vmatpush.xpose.msra.mxu0 0.0
    %126 = vmatpush.xpose.msra.mxu0 0.0
    %127 = vmatpush.xpose.msra.mxu0 0.0
    %128 = vmatpush.xpose.msra.mxu0 0.0
    %129 = vmatpush.xpose.msra.mxu0 %v112
    %130 = vmatmul.f32.gmra.mxu0 %v88
    %v131 = vpop.f32.mrf.mxu0
    %v132 = vadd.f32 %v49, %v131
    %133 = vmatmul.f32.gmra.mxu0 %v91
    %v134 = vpop.f32.mrf.mxu0
    %v135 = vadd.f32 %v54, %v134
    %136 = vmatmul.f32.gmra.mxu0 %v94
    %v137 = vpop.f32.mrf.mxu0
    %v138 = vadd.f32 %v59, %v137
    %139 = vmatmul.f32.gmra.mxu0 %v97
    %v140 = vpop.f32.mrf.mxu0
    %v141 = vadd.f32 %v64, %v140
    %142 = vmatmul.f32.gmra.mxu0 %v100
    %v143 = vpop.f32.mrf.mxu0
    %v144 = vadd.f32 %v69, %v143
    %145 = vmatmul.f32.gmra.mxu0 %v103
    %v146 = vpop.f32.mrf.mxu0
    %v147 = vadd.f32 %v74, %v146
    %148 = vmatmul.f32.gmra.mxu0 %v106
    %v149 = vpop.f32.mrf.mxu0
    %v150 = vadd.f32 %v79, %v149
    %151 = vmatmul.f32.gmra.mxu0 %v109
    %v152 = vpop.f32.mrf.mxu0
    %v153 = vadd.f32 %v84, %v152
    %154 = vdwg.mxu0
    %v155 = vmax.f32 %v132, 0.0
    %v156 = vmax.f32 %v135, 0.0
    %v157 = vmax.f32 %v138, 0.0
    %v158 = vmax.f32 %v141, 0.0
    %v159 = vmax.f32 %v144, 0.0
    %v160 = vmax.f32 %v147, 0.0
    %v161 = vmax.f32 %v150, 0.0
    %v162 = vmax.f32 %v153, 0.0
    %v163 = vld [vmem:[%s3] sm:$0xff]
    %v164 = vld [vmem:[%s3 + $0x8] sm:$0xff]
    %v165 = vld [vmem:[%s3 + $0x10] sm:$0xff]
    %v166 = vld [vmem:[%s3 + $0x18] sm:$0xff]
    %v167 = vld [vmem:[%s4] sm:$0xff]
    %v168 = vld [vmem:[%s4 + $0x8] sm:$0xff]
    %v169 = vld [vmem:[%s4 + $0x10] sm:$0xff]
    %v170 = vld [vmem:[%s4 + $0x18] sm:$0xff]
    %172 = vset.pattern.permute.xlu0 0
    %173 = vperm.xlu0 %172, %v167
    %v174 = vpop.permute.xlu0 %173
    %177 = vset.pattern.permute.xlu0 0
    %178 = vperm.xlu0 %177, %v168
    %v179 = vpop.permute.xlu0 %178
    %182 = vset.pattern.permute.xlu0 0
    %183 = vperm.xlu0 %182, %v169
    %v184 = vpop.permute.xlu0 %183
    %187 = vset.pattern.permute.xlu0 0
    %188 = vperm.xlu0 %187, %v170
    %v189 = vpop.permute.xlu0 %188
    %vm191 = vcmask 523264
    %v193 = vsel %vm191, %v163, 0
    %v196 = vsel %vm191, %v164, 0
    %v199 = vsel %vm191, %v165, 0
    %v202 = vsel %vm191, %v166, 0
    %204 = vmatpush.msra.mxu0 0.0
    %205 = vmatpush.msra.mxu0 0.0
    %206 = vmatpush.msra.mxu0 0.0
    %207 = vmatpush.msra.mxu0 0.0
    %208 = vmatpush.msra.mxu0 0.0
    %209 = vmatpush.msra.mxu0 0.0
    %210 = vmatpush.msra.mxu0 0.0
    %211 = vmatpush.msra.mxu0 0.0
    %212 = vmatpush.msra.mxu0 %v162
    %213 = vmatpush.msra.mxu0 %v161
    %214 = vmatpush.msra.mxu0 %v160
    %215 = vmatpush.msra.mxu0 %v159
    %216 = vmatpush.msra.mxu0 %v158
    %217 = vmatpush.msra.mxu0 %v157
    %218 = vmatpush.msra.mxu0 %v156
    %219 = vmatpush.msra.mxu0 %v155
    %220 = vmatmul.f32.gmra.mxu0 %v193
    %v221 = vpop.f32.mrf.mxu0
    %v222 = vadd.f32 %v174, %v221
    %223 = vmatmul.f32.gmra.mxu0 %v196
    %v224 = vpop.f32.mrf.mxu0
    %v225 = vadd.f32 %v179, %v224
    %226 = vmatmul.f32.gmra.mxu0 %v199
    %v227 = vpop.f32.mrf.mxu0
    %v228 = vadd.f32 %v184, %v227
    %229 = vmatmul.f32.gmra.mxu0 %v202
    %v230 = vpop.f32.mrf.mxu0
    %v231 = vadd.f32 %v189, %v230
    %232 = vdwg.mxu0
    %v233 = vmax.f32 %v222, 0.0
    %v234 = vmax.f32 %v225, 0.0
    %v235 = vmax.f32 %v228, 0.0
    %v236 = vmax.f32 %v231, 0.0
    %v237 = vld [vmem:[%s5] sm:$0xff]
    %v238 = vld [vmem:[%s5 + $0x8] sm:$0xff]
    %v239 = vld [vmem:[%s5 + $0x10] sm:$0xff]
    %v240 = vld [vmem:[%s5 + $0x18] sm:$0xff]
    %242 = vset.pattern.permute.xlu0 0
    %243 = vperm.xlu0 %242, %v237
    %v244 = vpop.permute.xlu0 %243
    %247 = vset.pattern.permute.xlu0 0
    %248 = vperm.xlu0 %247, %v238
    %v249 = vpop.permute.xlu0 %248
    %252 = vset.pattern.permute.xlu0 0
    %253 = vperm.xlu0 %252, %v239
    %v254 = vpop.permute.xlu0 %253
    %257 = vset.pattern.permute.xlu0 0
    %258 = vperm.xlu0 %257, %v240
    %v259 = vpop.permute.xlu0 %258
    %v261 = vmul.f32 %v233, %v244
    %v262 = vmul.f32 %v234, %v249
    %v263 = vmul.f32 %v235, %v254
    %v264 = vmul.f32 %v236, %v259
    %vm265 = vcmask 64512
    %v266 = vsel %vm265, %v261, 0.0
    %v267 = vsel %vm265, %v262, 0.0
    %v268 = vadd.f32 %v266, %v267
    %v269 = vsel %vm265, %v263, 0.0
    %v270 = vadd.f32 %v268, %v269
    %v271 = vsel %vm265, %v264, 0.0
    %v272 = vadd.f32 %v270, %v271
    %v273 = vrot.slane %v272, 4
    %v274 = vadd.f32 %v272, %v273
    %v275 = vrot.slane %v274, 2
    %v276 = vadd.f32 %v274, %v275
    %v277 = vrot.slane %v276, 1
    %v278 = vadd.f32 %v276, %v277
    %v279 = vld [vmem:[#allocation2] sm:$0x1]
    %281 = vset.pattern.permute.xlu0 0
    %282 = vperm.xlu0 %281, %v279
    %v283 = vpop.permute.xlu0 %282
    %v285 = vperm.slane %v283, 0
    %v286 = vadd.f32 %v278, %v285
    %v287 = vsub.f32 0.0, %v286
    %v288 = vmul.f32 %v287, 1.442695
    %v289 = vpow.pop %v288
    %v290 = vadd.f32 %v289, 1.0
    %v291 = vrcp.pop %v290
    %vm292 = vcmask 57344
    %293 = vst.msk [vmem:[#allocation3] sm:$0x1] %vm292, %v291
    // Predicated region
    $region30: #{tpu_custom_call.1} parent=1 // pred_check
      _
    $region31: #{tpu_custom_call.1} parent=1 // pred_check_branch
      %295 = sbr.rel (0) target = $region33
    $region32: #{tpu_custom_call.1} parent=1 // pred_region
      %297 = vsyncadd [#allocation4], 0
      %s299 = sshll.u32 [#allocation3], 4
      %s300 = int_to_ptr.vmem [resolvable:$true] %s299
      %s301 = sshll.u32 %s7, 4
      %s302 = int_to_ptr.hbm [resolvable:$true] %s301
      %304 = dma.vmem_to_hbm [thread:$0]  %s300, 16, %s302, [#allocation4]
    $region33: #{tpu_custom_call.1} parent=1 // pred_fallthru
      _
    // Predicated region
    $region34: #{tpu_custom_call.1} parent=1 // pred_check
      _
    $region35: #{tpu_custom_call.1} parent=1 // pred_check_branch
      %306 = sbr.rel (0) target = $region37
    $region36: #{tpu_custom_call.1} parent=1 // pred_region
      %308 = dma.done [#allocation4], 16
    $region37: #{tpu_custom_call.1} parent=1 // pred_fallthru
      _
    %309 = vsyncpa [#allocation4], 1

</llo_original>
